<compile_context>
chip_gen: v7x
topology: tpu7x:2x2x1
jax: 0.10.0
libtpu: 0.0.40
codegen_flags: <defaults>
</compile_context>

<pallas_src>
import math

import jax
import jax.numpy as jnp
from jax.experimental import pallas as pl
from jax.experimental.pallas import tpu as pltpu


def _cdiv(a, b):
    return -(-a // b)


def _round_up(n, m):
    return ((n + m - 1) // m) * m


def encoder_kernel(x_ref, w1_ref, b1_ref, wh_ref, bh_ref, out_ref):
    # fc1 on the MXU, f32 accumulation.
    h = jnp.dot(x_ref[...], w1_ref[...], preferred_element_type=jnp.float32)
    # Bias + ReLU in f32 on the VPU (free filler under MXU pushes; v5e-safe).
    h = jnp.maximum(h + b1_ref[...].astype(jnp.float32), 0.0)
    # Fused (mu|sigma) head, lane-padded to a multiple of 128 -> one wide,
    # unmasked store instead of two narrow masked stores.
    y = jnp.dot(h.astype(wh_ref.dtype), wh_ref[...],
                preferred_element_type=jnp.float32)
    y = y + bh_ref[...].astype(jnp.float32)
    out_ref[...] = y.astype(out_ref.dtype)


def pack_encoder_params(params, compute_dtype=None):
    """One-time parameter packing (NOT per forward).

    Fuses the mu|sigma heads into a single [H, 2Z] matrix, lane-pads the head
    to a multiple of 128 columns (zero columns -> lane-dense output stores),
    and optionally casts everything to a compute dtype (e.g. bf16 on v6e/v7x,
    halving weight DMA bytes and resident VMEM).
    """
    wh = jnp.concatenate([params["wmu"], params["wsigma"]], axis=1)
    bh = jnp.concatenate([params["bmu"], params["bsigma"]], axis=1)
    two_z = wh.shape[1]
    two_z_pad = _round_up(two_z, 128)
    if two_z_pad != two_z:
        wh = jnp.pad(wh, ((0, 0), (0, two_z_pad - two_z)))
        bh = jnp.pad(bh, ((0, 0), (0, two_z_pad - two_z)))
    packed = {"w1": params["w1"], "b1": params["b1"], "wh": wh, "bh": bh}
    if compute_dtype is not None:
        packed = {k: v.astype(compute_dtype) for k, v in packed.items()}
    return packed


def encoder_forward(x, packed, z_dim, *, batch_tile=256):
    """Returns (mu, sigma), matching PyTorch Encoder.forward semantics."""
    B, D = x.shape
    H = packed["w1"].shape[1]
    Zp2 = packed["wh"].shape[1]  # lane-padded 2 * z_dim (multiple of 128)

    x_bytes = jnp.dtype(x.dtype).itemsize
    w_bytes = jnp.dtype(packed["w1"].dtype).itemsize

    # Sublane alignment: 8 rows/vreg for 32-bit, 16 for packed sub-32-bit dtypes.
    sub = 8 if x_bytes >= 4 else 16

    # Tile selection: large tiles (amortize ~0.35us/step grid overhead), even
    # split to minimize padding waste, and >= 2 steps when possible so the
    # "parallel" batch axis shards across v7x's two TensorCores.
    bp_min = _round_up(B, sub)
    target = max(sub, _round_up(batch_tile, sub))
    n_steps = _cdiv(bp_min, target)
    if bp_min > sub:
        n_steps = max(n_steps, 2)
    tile = _round_up(_cdiv(bp_min, n_steps), sub)
    n_steps = _cdiv(bp_min, tile)
    Bp = tile * n_steps
    if Bp != B:
        x = jnp.pad(x, ((0, Bp - B), (0, 0)))
    grid = (n_steps,)

    # VMEM budget: double-buffered x / out tiles + single-buffered resident
    # weights + headroom for the f32 intermediates.
    vmem_needed = (
        2 * tile * D * x_bytes                       # x (2 buffers)
        + (D * H + H + H * Zp2 + Zp2) * w_bytes      # resident weights (1 buffer)
        + 2 * tile * Zp2 * x_bytes                   # out (2 buffers)
        + tile * H * 4                               # (tile, H) f32 intermediate
        + tile * Zp2 * 4                             # (tile, Zp2) f32 accumulator
    )
    vmem_limit = int(min(max(int(vmem_needed * 1.25) + (2 << 20), 8 << 20),
                         128 << 20))

    cost = pl.CostEstimate(
        flops=2 * Bp * (D * H + H * Zp2),
        transcendentals=0,
        bytes_accessed=(Bp * D * x_bytes
                        + (D * H + H + H * Zp2 + Zp2) * w_bytes
                        + Bp * Zp2 * x_bytes),
    )

    resident = dict(pipeline_mode=pl.Buffered(1))  # single-buffer resident weights

    out = pl.pallas_call(
        encoder_kernel,
        out_shape=jax.ShapeDtypeStruct((Bp, Zp2), x.dtype),
        grid_spec=pltpu.PrefetchScalarGridSpec(
            num_scalar_prefetch=0,
            grid=grid,
            in_specs=[
                pl.BlockSpec((tile, D), lambda i: (i, 0)),               # x tile
                pl.BlockSpec((D, H), lambda i: (0, 0), **resident),      # w1
                pl.BlockSpec((1, H), lambda i: (0, 0), **resident),      # b1
                pl.BlockSpec((H, Zp2), lambda i: (0, 0), **resident),    # wmu|wsigma
                pl.BlockSpec((1, Zp2), lambda i: (0, 0), **resident),    # bmu|bsigma
            ],
            out_specs=pl.BlockSpec((tile, Zp2), lambda i: (i, 0)),
        ),
        compiler_params=pltpu.CompilerParams(
            dimension_semantics=("parallel",),
            vmem_limit_bytes=vmem_limit,
        ),
        cost_estimate=cost,
    )(x, packed["w1"], packed["b1"], packed["wh"], packed["bh"])

    # Slice off batch padding and lane padding; sigma lives at [Z:2Z] of the
    # unpadded head region.
    mu = out[:B, :z_dim]
    sigma = out[:B, z_dim:2 * z_dim]
    return mu, sigma


def init_linear(key, fan_in, fan_out, dtype=jnp.float32):
    # PyTorch nn.Linear default init: U(-1/sqrt(fan_in), 1/sqrt(fan_in)).
    kw, kb = jax.random.split(key)
    bound = 1.0 / math.sqrt(fan_in)
    w = jax.random.uniform(kw, (fan_in, fan_out), dtype, -bound, bound)  # [in, out]
    b = jax.random.uniform(kb, (1, fan_out), dtype, -bound, bound)
    return w, b


def reference_forward(x, params):
    h = jnp.maximum(x @ params["w1"] + params["b1"], 0.0)
    mu = h @ params["wmu"] + params["bmu"]
    sigma = h @ params["wsigma"] + params["bsigma"]
    return mu, sigma


if __name__ == "__main__":
    key = jax.random.PRNGKey(0)
    k_x, k1, k2, k3 = jax.random.split(key, 4)

    # Small shapes implied by the module; ragged batch (13) exercises padding.
    batch, input_dim, h_dim, z_dim = 13, 32, 64, 16

    x = jax.random.normal(k_x, (batch, input_dim), jnp.float32)

    w1, b1 = init_linear(k1, input_dim, h_dim)
    wmu, bmu = init_linear(k2, h_dim, z_dim)
    wsig, bsig = init_linear(k3, h_dim, z_dim)
    params = {"w1": w1, "b1": b1, "wmu": wmu, "bmu": bmu,
              "wsigma": wsig, "bsigma": bsig}

    mu_ref, sigma_ref = reference_forward(x, params)

    # f32 path (one-time packing hoisted off the forward path).
    packed = pack_encoder_params(params)
    mu, sigma = encoder_forward(x, packed, z_dim)
    jax.block_until_ready((mu, sigma))

    assert mu.shape == (batch, z_dim) and sigma.shape == (batch, z_dim)
    assert jnp.allclose(mu, mu_ref, atol=1e-5, rtol=1e-5)
    assert jnp.allclose(sigma, sigma_ref, atol=1e-5, rtol=1e-5)

    # bf16 operand path (v6e/v7x): half the weight DMA bytes / resident VMEM,
    # bf16 MXU with f32 accumulation inside the kernel. Looser tolerance.
    packed_bf16 = pack_encoder_params(params, compute_dtype=jnp.bfloat16)
    mu_b, sigma_b = encoder_forward(x.astype(jnp.bfloat16), packed_bf16, z_dim)
    jax.block_until_ready((mu_b, sigma_b))
    assert jnp.allclose(mu_b.astype(jnp.float32), mu_ref, atol=7.5e-2, rtol=7.5e-2)
    assert jnp.allclose(sigma_b.astype(jnp.float32), sigma_ref, atol=7.5e-2, rtol=7.5e-2)

    print("KERNEL_OK")
</pallas_src>

<mosaic_0001>
module attributes {stable_mosaic.version = 11 : i64} {
  func.func @encoder_kernel(%arg0: i32, %arg1: memref<8x32xf32, #tpu.memory_space<vmem>>, %arg2: memref<32x64xf32, #tpu.memory_space<vmem>>, %arg3: memref<1x64xf32, #tpu.memory_space<vmem>>, %arg4: memref<64x128xf32, #tpu.memory_space<vmem>>, %arg5: memref<1x128xf32, #tpu.memory_space<vmem>>, %arg6: memref<8x128xf32, #tpu.memory_space<vmem>>) attributes {dimension_semantics = [#tpu.dimension_semantics<parallel>], iteration_bounds = array<i64: 2>, scalar_prefetch = 0 : i64, scratch_operands = 0 : i64, tpu.core_type = #tpu.core_type<tc>, window_params = [{transform_indices = @transform_0, window_bounds = array<i64: 8, 32>}, {pipeline_mode = #tpu.pipeline_mode<synchronous>, transform_indices = @transform_1, window_bounds = array<i64: 32, 64>}, {pipeline_mode = #tpu.pipeline_mode<synchronous>, transform_indices = @transform_2, window_bounds = array<i64: 1, 64>}, {pipeline_mode = #tpu.pipeline_mode<synchronous>, transform_indices = @transform_3, window_bounds = array<i64: 64, 128>}, {pipeline_mode = #tpu.pipeline_mode<synchronous>, transform_indices = @transform_4, window_bounds = array<i64: 1, 128>}, {transform_indices = @transform_5, window_bounds = array<i64: 8, 128>}]} {
    %c0 = arith.constant 0 : index
    %c0_0 = arith.constant 0 : index
    %0 = vector.load %arg1[%c0, %c0_0] : memref<8x32xf32, #tpu.memory_space<vmem>>, vector<8x32xf32>
    %c0_1 = arith.constant 0 : index
    %c0_2 = arith.constant 0 : index
    %1 = vector.load %arg2[%c0_1, %c0_2] : memref<32x64xf32, #tpu.memory_space<vmem>>, vector<32x64xf32>
    %cst = arith.constant dense<0.000000e+00> : vector<8x64xf32>
    %2 = tpu.matmul %0, %1, %cst {dimension_numbers = #tpu.dot_dimension_numbers<[1], [0], [0], [1], [0, 0, 1, 1], [], []>} : vector<8x32xf32>, vector<32x64xf32>, vector<8x64xf32> -> vector<8x64xf32>
    %c0_3 = arith.constant 0 : index
    %c0_4 = arith.constant 0 : index
    %3 = vector.load %arg3[%c0_3, %c0_4] : memref<1x64xf32, #tpu.memory_space<vmem>>, vector<1x64xf32>
    %4 = vector.broadcast %3 : vector<1x64xf32> to vector<8x64xf32>
    %5 = arith.addf %2, %4 : vector<8x64xf32>
    %cst_5 = arith.constant 0.000000e+00 : f32
    %6 = vector.broadcast %cst_5 : f32 to vector<8x64xf32>
    %7 = arith.maximumf %5, %6 : vector<8x64xf32>
    %c0_6 = arith.constant 0 : index
    %c0_7 = arith.constant 0 : index
    %8 = vector.load %arg4[%c0_6, %c0_7] : memref<64x128xf32, #tpu.memory_space<vmem>>, vector<64x128xf32>
    %cst_8 = arith.constant dense<0.000000e+00> : vector<8x128xf32>
    %9 = tpu.matmul %7, %8, %cst_8 {dimension_numbers = #tpu.dot_dimension_numbers<[1], [0], [0], [1], [0, 0, 1, 1], [], []>} : vector<8x64xf32>, vector<64x128xf32>, vector<8x128xf32> -> vector<8x128xf32>
    %c0_9 = arith.constant 0 : index
    %c0_10 = arith.constant 0 : index
    %10 = vector.load %arg5[%c0_9, %c0_10] : memref<1x128xf32, #tpu.memory_space<vmem>>, vector<1x128xf32>
    %11 = vector.broadcast %10 : vector<1x128xf32> to vector<8x128xf32>
    %12 = arith.addf %9, %11 : vector<8x128xf32>
    %c0_11 = arith.constant 0 : index
    %c0_12 = arith.constant 0 : index
    %13 = vector.load %arg6[%c0_11, %c0_12] : memref<8x128xf32, #tpu.memory_space<vmem>>, vector<8x128xf32>
    tpu.vector_store %arg6[%c0_11, %c0_12], %12 {strides = array<i32>} : memref<8x128xf32, #tpu.memory_space<vmem>>, vector<8x128xf32>,
    return
  }
  func.func @transform_0(%arg0: i32) -> (i32, i32) {
    %c0_i32 = arith.constant 0 : i32
    %c0_i32_0 = arith.constant 0 : i32
    return %arg0, %c0_i32 : i32, i32
  }
  func.func @transform_1(%arg0: i32) -> (i32, i32) {
    %c0_i32 = arith.constant 0 : i32
    %c0_i32_0 = arith.constant 0 : i32
    %c0_i32_1 = arith.constant 0 : i32
    return %c0_i32, %c0_i32_0 : i32, i32
  }
  func.func @transform_2(%arg0: i32) -> (i32, i32) {
    %c0_i32 = arith.constant 0 : i32
    %c0_i32_0 = arith.constant 0 : i32
    %c0_i32_1 = arith.constant 0 : i32
    return %c0_i32, %c0_i32_0 : i32, i32
  }
  func.func @transform_3(%arg0: i32) -> (i32, i32) {
    %c0_i32 = arith.constant 0 : i32
    %c0_i32_0 = arith.constant 0 : i32
    %c0_i32_1 = arith.constant 0 : i32
    return %c0_i32, %c0_i32_0 : i32, i32
  }
  func.func @transform_4(%arg0: i32) -> (i32, i32) {
    %c0_i32 = arith.constant 0 : i32
    %c0_i32_0 = arith.constant 0 : i32
    %c0_i32_1 = arith.constant 0 : i32
    return %c0_i32, %c0_i32_0 : i32, i32
  }
  func.func @transform_5(%arg0: i32) -> (i32, i32) {
    %c0_i32 = arith.constant 0 : i32
    %c0_i32_0 = arith.constant 0 : i32
    return %arg0, %c0_i32 : i32, i32
  }
}

</mosaic_0001>

<llo_original>
// kernel: tpu_custom_call.1
$region0: #{tpu_custom_call.1}
  #allocation0 [shape = 'u32[]', space=smem, size = 0x4, offset = 0x4, fixed_abs, tag = 'smem constant byte address 0x4 - core index']
  #allocation1 [shape = 'u32[144,128]{1,0:T(1,128)}', space=vmem, size = 0x12000, scoped, tag = 'internal scratch']
  %s0 = inlined_call_operand.hbm [shape: f32[16,32], index: 0, kind: input, shape index: {}]
  %s1 = inlined_call_operand.hbm [shape: f32[32,64], index: 1, kind: input, shape index: {}]
  %s2 = inlined_call_operand.vmem [shape: f32[1,64], index: 2, kind: input, shape index: {}]
  %s3 = inlined_call_operand.hbm [shape: f32[64,128], index: 3, kind: input, shape index: {}]
  %s4 = inlined_call_operand.vmem [shape: f32[1,128], index: 4, kind: input, shape index: {}]
  %s5 = inlined_call_operand.hbm [shape: f32[16,128], index: 5, kind: output, shape index: {}]
  %s6 = sld [smem:[#allocation0]]
  $region65: #{tpu_custom_call.1} parent=0
    _
  %s8 = ssub.s32 1, %s6
  %s9 = scalar_select 0, %s8, %s6
  $region1: #{tpu_custom_call.1} parent=0
    #allocation2 [shape = 'u8[8192]{0}', space=vmem, size = 0x2000, scoped, tag = 'input window, operand 0']
    #allocation3 [shape = 's32[2]{0}', space=sflag, size = 0x8, scoped, tag = 'scoped memory for tpu_custom_call.1']
    #allocation4 [shape = 's32[2]{0}', space=sflag, size = 0x8, scoped, tag = 'scoped memory for tpu_custom_call.1']
    #allocation5 [shape = 'u8[16384]{0}', space=vmem, size = 0x4000, scoped, tag = 'input window, operand 1, single buffered']
    #allocation6 [shape = 's32[1]{0}', space=sflag, size = 0x4, scoped, tag = 'scoped memory for tpu_custom_call.1']
    #allocation7 [shape = 'u8[32768]{0}', space=vmem, size = 0x8000, scoped, tag = 'input window, operand 3, single buffered']
    #allocation8 [shape = 'u8[8192]{0}', space=vmem, size = 0x2000, scoped, tag = 'output window, operand 0']
    %10 = vsyncpa [#allocation3], 0
    %s11 = scalar_lea.sflag [#allocation3], 1
    %12 = vsyncpa %s11, 0
    %13 = vsyncpa [#allocation6], 0
    %14 = vsyncpa [#allocation4], 0
    %s15 = scalar_lea.sflag [#allocation4], 1
    %16 = vsyncpa %s15, 0
    loop: start=0, step=1, limit=4
    $region2: #{tpu_custom_call.1} parent=1 // loop_pre_header
      _
    $region3: #{tpu_custom_call.1} parent=1 // loop_header
      %s18 = sphi 0, %s22
      %p19 = scmp.ge.s32.totalorder %s18, 4
      %s28 = sphi 0, %s30
      %s31 = sphi 0, %s28
      %s32 = sphi 0, %s31
      %s48 = sphi 0, %s32
      %s52 = sphi 0, %s52
      %s54 = sphi 0, %s52
      %s55 = sphi 0, %s54
      %s69 = sphi 0, %s55
      %s73 = sphi 0, %s73
      %s75 = sphi 0, %s73
      %s76 = sphi 0, %s75
      %s90 = sphi 0, %s76
      %s94 = sphi 0, %s94
      %s96 = sphi 0, %s94
      %s97 = sphi 0, %s96
      %s111 = sphi 0, %s97
      %s115 = sphi 0, %s115
      %s117 = sphi 0, %s115
      %s118 = sphi 0, %s117
      %s132 = sphi 0, %s118
      %s138 = sphi 0, %s140
      %s141 = sphi 0, %s138
      %s142 = sphi 0, %s141
      %s158 = sphi 0, %s142
    $region4: #{tpu_custom_call.1} parent=1 // loop_header_branch
      %21 = sbr.rel (%p19) target = $region8
    $region5: #{tpu_custom_call.1} parent=1 // loop_body
      %s23 = ssub.s32 %s18, 1
      %s24 = ssub.s32 %s18, 2
      %s25 = sadd.s32 %s18, 1
      %s26 = ssub.s32 %s18, %s25
      %p27 = scmp.eq.s32.totalorder %s26, 0
      %s29 = sadd.s32 %s28, 1
      %s30 = scalar_select %p27, %s28, %s29
      %p33 = pneg %p27
      %p34 = scmp.eq.s32.totalorder %s18, 1
      %p35 = por %p33, %p34
      %p36 = scmp.ne.s32.totalorder %s28, %s31
      %p37 = scmp.eq.s32.totalorder %s18, 0
      %p38 = por %p36, %p37
      %p39 = scmp.ne.s32.totalorder %s28, %s31
      %p40 = scmp.eq.s32.totalorder %s23, 1
      %p41 = por %p39, %p40
      %p42 = scmp.ne.s32.totalorder %s31, %s32
      %p43 = scmp.eq.s32.totalorder %s23, 0
      %p44 = por %p42, %p43
      %p45 = scmp.ne.s32.totalorder %s31, %s32
      %p46 = scmp.eq.s32.totalorder %s24, 1
      %p47 = por %p45, %p46
      %p49 = scmp.ne.s32.totalorder %s32, %s48
      %p50 = scmp.eq.s32.totalorder %s24, 0
      %p51 = por %p49, %p50
      %s53 = sadd.s32 %s52, 1
      %p56 = scmp.eq.s32.totalorder %s18, 1
      %p57 = scmp.ne.s32.totalorder %s52, %s54
      %p58 = scmp.eq.s32.totalorder %s18, 0
      %p59 = por %p57, %p58
      %p60 = scmp.ne.s32.totalorder %s52, %s54
      %p61 = scmp.eq.s32.totalorder %s23, 1
      %p62 = por %p60, %p61
      %p63 = scmp.ne.s32.totalorder %s54, %s55
      %p64 = scmp.eq.s32.totalorder %s23, 0
      %p65 = por %p63, %p64
      %p66 = scmp.ne.s32.totalorder %s54, %s55
      %p67 = scmp.eq.s32.totalorder %s24, 1
      %p68 = por %p66, %p67
      %p70 = scmp.ne.s32.totalorder %s55, %s69
      %p71 = scmp.eq.s32.totalorder %s24, 0
      %p72 = por %p70, %p71
      %s74 = sadd.s32 %s73, 1
      %p77 = scmp.eq.s32.totalorder %s18, 1
      %p78 = scmp.ne.s32.totalorder %s73, %s75
      %p79 = scmp.eq.s32.totalorder %s18, 0
      %p80 = por %p78, %p79
      %p81 = scmp.ne.s32.totalorder %s73, %s75
      %p82 = scmp.eq.s32.totalorder %s23, 1
      %p83 = por %p81, %p82
      %p84 = scmp.ne.s32.totalorder %s75, %s76
      %p85 = scmp.eq.s32.totalorder %s23, 0
      %p86 = por %p84, %p85
      %p87 = scmp.ne.s32.totalorder %s75, %s76
      %p88 = scmp.eq.s32.totalorder %s24, 1
      %p89 = por %p87, %p88
      %p91 = scmp.ne.s32.totalorder %s76, %s90
      %p92 = scmp.eq.s32.totalorder %s24, 0
      %p93 = por %p91, %p92
      %s95 = sadd.s32 %s94, 1
      %p98 = scmp.eq.s32.totalorder %s18, 1
      %p99 = scmp.ne.s32.totalorder %s94, %s96
      %p100 = scmp.eq.s32.totalorder %s18, 0
      %p101 = por %p99, %p100
      %p102 = scmp.ne.s32.totalorder %s94, %s96
      %p103 = scmp.eq.s32.totalorder %s23, 1
      %p104 = por %p102, %p103
      %p105 = scmp.ne.s32.totalorder %s96, %s97
      %p106 = scmp.eq.s32.totalorder %s23, 0
      %p107 = por %p105, %p106
      %p108 = scmp.ne.s32.totalorder %s96, %s97
      %p109 = scmp.eq.s32.totalorder %s24, 1
      %p110 = por %p108, %p109
      %p112 = scmp.ne.s32.totalorder %s97, %s111
      %p113 = scmp.eq.s32.totalorder %s24, 0
      %p114 = por %p112, %p113
      %s116 = sadd.s32 %s115, 1
      %p119 = scmp.eq.s32.totalorder %s18, 1
      %p120 = scmp.ne.s32.totalorder %s115, %s117
      %p121 = scmp.eq.s32.totalorder %s18, 0
      %p122 = por %p120, %p121
      %p123 = scmp.ne.s32.totalorder %s115, %s117
      %p124 = scmp.eq.s32.totalorder %s23, 1
      %p125 = por %p123, %p124
      %p126 = scmp.ne.s32.totalorder %s117, %s118
      %p127 = scmp.eq.s32.totalorder %s23, 0
      %p128 = por %p126, %p127
      %p129 = scmp.ne.s32.totalorder %s117, %s118
      %p130 = scmp.eq.s32.totalorder %s24, 1
      %p131 = por %p129, %p130
      %p133 = scmp.ne.s32.totalorder %s118, %s132
      %p134 = scmp.eq.s32.totalorder %s24, 0
      %p135 = por %p133, %p134
      %s136 = ssub.s32 %s18, %s25
      %p137 = scmp.eq.s32.totalorder %s136, 0
      %s139 = sadd.s32 %s138, 1
      %s140 = scalar_select %p137, %s138, %s139
      %p143 = pneg %p137
      %p144 = scmp.eq.s32.totalorder %s18, 1
      %p145 = por %p143, %p144
      %p146 = scmp.ne.s32.totalorder %s138, %s141
      %p147 = scmp.eq.s32.totalorder %s18, 0
      %p148 = por %p146, %p147
      %p149 = scmp.ne.s32.totalorder %s138, %s141
      %p150 = scmp.eq.s32.totalorder %s23, 1
      %p151 = por %p149, %p150
      %p152 = scmp.ne.s32.totalorder %s141, %s142
      %p153 = scmp.eq.s32.totalorder %s23, 0
      %p154 = por %p152, %p153
      %p155 = scmp.ne.s32.totalorder %s141, %s142
      %p156 = scmp.eq.s32.totalorder %s24, 1
      %p157 = por %p155, %p156
      %p159 = scmp.ne.s32.totalorder %s142, %s158
      %p160 = scmp.eq.s32.totalorder %s24, 0
      %p161 = por %p159, %p160
      %p162 = scmp.le.s32.totalorder 1, %s18
      %p163 = scmp.lt.s32.totalorder %s18, 3
      %p164 = pnand %p162, %p163
      %p165 = pneg %p164
      // Predicated region
      $region9: #{tpu_custom_call.1} parent=5 // pred_check
        _
      $region10: #{tpu_custom_call.1} parent=5 // pred_check_branch
        %167 = sbr.rel (%p164) target = $region12
      $region11: #{tpu_custom_call.1} parent=5 // pred_region
        %s168 = ssub.s32 %s18, 1
        // Predicated region
        $region13: #{tpu_custom_call.1} parent=11 // pred_check
          %p169 = pneg %p65
        $region14: #{tpu_custom_call.1} parent=11 // pred_check_branch
          %171 = sbr.rel (%p169) target = $region16
        $region15: #{tpu_custom_call.1} parent=11 // pred_region
          %s173 = ssub.s32 512, 512
          %174 = vsyncadd [#allocation6], %s173
          %s175 = sshll.u32 [#allocation5], 4
          %s176 = int_to_ptr.vmem [resolvable:$true] %s175
          %181 = dma.hbm_to_vmem [thread:$0]  %s1, 512, %s176, [#allocation6], 128, 128, 8
        $region16: #{tpu_custom_call.1} parent=11 // pred_fallthru
          _
        // Predicated region
        $region17: #{tpu_custom_call.1} parent=11 // pred_check
          %p182 = pneg %p86
        $region18: #{tpu_custom_call.1} parent=11 // pred_check_branch
          %184 = sbr.rel (%p182) target = $region20
        $region19: #{tpu_custom_call.1} parent=11 // pred_region
          _
        $region20: #{tpu_custom_call.1} parent=11 // pred_fallthru
          _
        // Predicated region
        $region21: #{tpu_custom_call.1} parent=11 // pred_check
          %p185 = pneg %p107
        $region22: #{tpu_custom_call.1} parent=11 // pred_check_branch
          %187 = sbr.rel (%p185) target = $region24
        $region23: #{tpu_custom_call.1} parent=11 // pred_region
          %s189 = ssub.s32 1024, 1024
          %190 = vsyncadd [#allocation6], %s189
          %s191 = sshll.u32 [#allocation7], 4
          %s192 = int_to_ptr.vmem [resolvable:$true] %s191
          %197 = dma.hbm_to_vmem [thread:$0]  %s3, 1024, %s192, [#allocation6], 128, 128, 8
        $region24: #{tpu_custom_call.1} parent=11 // pred_fallthru
          _
        // Predicated region
        $region25: #{tpu_custom_call.1} parent=11 // pred_check
          %p198 = pneg %p128
        $region26: #{tpu_custom_call.1} parent=11 // pred_check_branch
          %200 = sbr.rel (%p198) target = $region28
        $region27: #{tpu_custom_call.1} parent=11 // pred_region
          _
        $region28: #{tpu_custom_call.1} parent=11 // pred_fallthru
          _
      $region12: #{tpu_custom_call.1} parent=5 // pred_fallthru
        _
      %p201 = scmp.lt.s32.totalorder %s18, 2
      // Predicated region
      $region29: #{tpu_custom_call.1} parent=5 // pred_check
        %p202 = pneg %p201
      $region30: #{tpu_custom_call.1} parent=5 // pred_check_branch
        %204 = sbr.rel (%p202) target = $region32
      $region31: #{tpu_custom_call.1} parent=5 // pred_region
        // Predicated region
        $region33: #{tpu_custom_call.1} parent=31 // pred_check
          %p205 = pneg %p38
        $region34: #{tpu_custom_call.1} parent=31 // pred_check_branch
          %207 = sbr.rel (%p205) target = $region36
        $region35: #{tpu_custom_call.1} parent=31 // pred_region
          %s208 = sand.u32 %s28, 1
          %s209 = scalar_lea.sflag [#allocation3], %s208
          %s210 = sand.u32 %s28, 1
          %s211 = smul.addr %s210, 8
          %s212 = scalar_lea.vmem [#allocation2], %s211
          %s214 = ssub.s32 128, 128
          %215 = vsyncadd %s209, %s214
          %s216 = smul.addr %s18, 128
          %s217 = scalar_lea.hbm %s0, %s216
          %s219 = sshll.u32 %s212, 4
          %s220 = int_to_ptr.vmem [resolvable:$true] %s219
          %222 = dma.hbm_to_vmem [thread:$0]  %s217, 128, %s220, %s209
        $region36: #{tpu_custom_call.1} parent=31 // pred_fallthru
          _
      $region32: #{tpu_custom_call.1} parent=5 // pred_fallthru
        _
      %p223 = scmp.le.s32.totalorder 1, %s18
      %p224 = scmp.lt.s32.totalorder %s18, 3
      %p225 = pnand %p223, %p224
      %p226 = pneg %p225
      // Predicated region
      $region37: #{tpu_custom_call.1} parent=5 // pred_check
        _
      $region38: #{tpu_custom_call.1} parent=5 // pred_check_branch
        %228 = sbr.rel (%p225) target = $region40
      $region39: #{tpu_custom_call.1} parent=5 // pred_region
        %s229 = ssub.s32 %s18, 1
        %s230 = sand.u32 %s31, 1
        %s231 = scalar_lea.sflag [#allocation3], %s230
        %s232 = sand.u32 %s31, 1
        %s233 = smul.addr %s232, 8
        %s234 = scalar_lea.vmem [#allocation2], %s233
        // Predicated region
        $region41: #{tpu_custom_call.1} parent=39 // pred_check
          %p235 = pneg %p44
        $region42: #{tpu_custom_call.1} parent=39 // pred_check_branch
          %237 = sbr.rel (%p235) target = $region44
        $region43: #{tpu_custom_call.1} parent=39 // pred_region
          %238 = dma.done %s231, 128
        $region44: #{tpu_custom_call.1} parent=39 // pred_fallthru
          _
        // Predicated region
        $region45: #{tpu_custom_call.1} parent=39 // pred_check
          %p239 = pneg %p65
        $region46: #{tpu_custom_call.1} parent=39 // pred_check_branch
          %241 = sbr.rel (%p239) target = $region48
        $region47: #{tpu_custom_call.1} parent=39 // pred_region
          %242 = dma.done [#allocation6], 512
        $region48: #{tpu_custom_call.1} parent=39 // pred_fallthru
          _
        // Predicated region
        $region49: #{tpu_custom_call.1} parent=39 // pred_check
          %p243 = pneg %p107
        $region50: #{tpu_custom_call.1} parent=39 // pred_check_branch
          %245 = sbr.rel (%p243) target = $region52
        $region51: #{tpu_custom_call.1} parent=39 // pred_region
          %246 = dma.done [#allocation6], 1024
        $region52: #{tpu_custom_call.1} parent=39 // pred_fallthru
          _
        %s247 = sand.u32 %s31, 1
        %s248 = scalar_lea.sflag [#allocation3], %s247
        %s249 = sand.u32 %s31, 1
        %s250 = smul.addr %s249, 8
        %s251 = scalar_lea.vmem [#allocation2], %s250
        %p252 = pneg %p44
        %p253 = pneg %p41
        %p254 = pneg %p65
        %p255 = pneg %p62
        %p256 = pneg %p86
        %p257 = pneg %p83
        %p258 = pneg %p107
        %p259 = pneg %p104
        %p260 = pneg %p128
        %p261 = pneg %p125
        %p262 = pneg %p154
        %p263 = pneg %p151
        %s264 = sand.u32 %s141, 1
        %s265 = scalar_lea.sflag [#allocation4], %s264
        %s266 = sand.u32 %s141, 1
        %s267 = smul.addr %s266, 8
        %s268 = scalar_lea.vmem [#allocation8], %s267
        %v269 = vld [vmem:[%s234] sm:$0xff]
        %v270 = vld [vmem:[#allocation5] sm:$0xff]
        %v271 = vld [vmem:[#allocation5 + $0x8] sm:$0xff]
        %v272 = vld [vmem:[#allocation5 + $0x10] sm:$0xff]
        %v273 = vld [vmem:[#allocation5 + $0x18] sm:$0xff]
        %v274 = vld [vmem:[%s2] sm:$0x1]
        %v276 = vlaneseq
        %v277 = vshrl.u32 %v276, 7
        %v278 = vsub.s32 0, %v277
        %v279 = vrot.slane %v274, %v278
        %vm281 = vcmask 261120
        %v283 = vsel %vm281, %v269, 0
        %285 = vmatprep.subr.mxu0 0.0
        %286 = vmatpush1.msra.mxu0 %v270
        %287 = vmatprep.subr.mxu0 0.0
        %288 = vmatpush1.msra.mxu0 %v271
        %289 = vmatprep.subr.mxu0 0.0
        %290 = vmatpush1.msra.mxu0 %v272
        %291 = vmatprep.subr.mxu0 0.0
        %292 = vmatpush1.msra.mxu0 %v273
        %293 = vmatprep.subr.mxu0 0.0
        %294 = vmatpush1.msra.mxu0 0.0
        %295 = vmatprep.subr.mxu0 0.0
        %296 = vmatpush1.msra.mxu0 0.0
        %297 = vmatprep.subr.mxu0 0.0
        %298 = vmatpush1.msra.mxu0 0.0
        %299 = vmatprep.subr.mxu0 0.0
        %300 = vmatpush1.msra.mxu0 0.0
        %301 = vmatprep.subr.mxu0 0.0
        %302 = vmatpush1.msra.mxu0 0.0
        %303 = vmatprep.subr.mxu0 0.0
        %304 = vmatpush1.msra.mxu0 0.0
        %305 = vmatprep.subr.mxu0 0.0
        %306 = vmatpush1.msra.mxu0 0.0
        %307 = vmatprep.subr.mxu0 0.0
        %308 = vmatpush1.msra.mxu0 0.0
        %309 = vmatprep.subr.mxu0 0.0
        %310 = vmatpush1.msra.mxu0 0.0
        %311 = vmatprep.subr.mxu0 0.0
        %312 = vmatpush1.msra.mxu0 0.0
        %313 = vmatprep.subr.mxu0 0.0
        %314 = vmatpush1.msra.mxu0 0.0
        %315 = vmatprep.subr.mxu0 0.0
        %316 = vmatpush1.msra.mxu0 0.0
        %317 = vmatprep.subr.mxu0 0.0
        %318 = vmatpush1.msra.mxu0 0.0
        %319 = vmatprep.subr.mxu0 0.0
        %320 = vmatpush1.msra.mxu0 0.0
        %321 = vmatprep.subr.mxu0 0.0
        %322 = vmatpush1.msra.mxu0 0.0
        %323 = vmatprep.subr.mxu0 0.0
        %324 = vmatpush1.msra.mxu0 0.0
        %325 = vmatprep.subr.mxu0 0.0
        %326 = vmatpush1.msra.mxu0 0.0
        %327 = vmatprep.subr.mxu0 0.0
        %328 = vmatpush1.msra.mxu0 0.0
        %329 = vmatprep.subr.mxu0 0.0
        %330 = vmatpush1.msra.mxu0 0.0
        %331 = vmatprep.subr.mxu0 0.0
        %332 = vmatpush1.msra.mxu0 0.0
        %333 = vmatprep.subr.mxu0 0.0
        %334 = vmatpush1.msra.mxu0 0.0
        %335 = vmatprep.subr.mxu0 0.0
        %336 = vmatpush1.msra.mxu0 0.0
        %337 = vmatprep.subr.mxu0 0.0
        %338 = vmatpush1.msra.mxu0 0.0
        %339 = vmatprep.subr.mxu0 0.0
        %340 = vmatpush1.msra.mxu0 0.0
        %341 = vmatprep.subr.mxu0 0.0
        %342 = vmatpush1.msra.mxu0 0.0
        %343 = vmatprep.subr.mxu0 0.0
        %344 = vmatpush1.msra.mxu0 0.0
        %345 = vmatprep.subr.mxu0 0.0
        %346 = vmatpush1.msra.mxu0 0.0
        %347 = vmatprep.subr.mxu0 0.0
        %348 = vmatpush1.msra.mxu0 0.0
        %349 = vmatprep.mubr.f32.mxu0 0.0
        %350 = vmatmul.mubr.f32.gmra.mrb[0].mxu0 %v283
        %v351 = vpop.f32.mrb[0].mxu0
        %v352 = vadd.f32 %v279, %v351
        %v353 = vpop.f32.mrb[0].mxu0
        %354 = vdwg.mxu0
        %v355 = vmax.f32 %v352, 0.0
        %v356 = vld [vmem:[#allocation7] sm:$0xff]
        %v357 = vld [vmem:[#allocation7 + $0x8] sm:$0xff]
        %v358 = vld [vmem:[#allocation7 + $0x10] sm:$0xff]
        %v359 = vld [vmem:[#allocation7 + $0x18] sm:$0xff]
        %v360 = vld [vmem:[#allocation7 + $0x20] sm:$0xff]
        %v361 = vld [vmem:[#allocation7 + $0x28] sm:$0xff]
        %v362 = vld [vmem:[#allocation7 + $0x30] sm:$0xff]
        %v363 = vld [vmem:[#allocation7 + $0x38] sm:$0xff]
        %v364 = vld [vmem:[%s4] sm:$0x1]
        %v366 = vlaneseq
        %v367 = vshrl.u32 %v366, 7
        %v368 = vsub.s32 0, %v367
        %v369 = vrot.slane %v364, %v368
        %vm371 = vcmask 523264
        %v373 = vsel %vm371, %v355, 0
        %375 = vmatprep.subr.mxu0 0.0
        %376 = vmatpush1.msra.mxu0 %v356
        %377 = vmatprep.subr.mxu0 0.0
        %378 = vmatpush1.msra.mxu0 %v357
        %379 = vmatprep.subr.mxu0 0.0
        %380 = vmatpush1.msra.mxu0 %v358
        %381 = vmatprep.subr.mxu0 0.0
        %382 = vmatpush1.msra.mxu0 %v359
        %383 = vmatprep.subr.mxu0 0.0
        %384 = vmatpush1.msra.mxu0 %v360
        %385 = vmatprep.subr.mxu0 0.0
        %386 = vmatpush1.msra.mxu0 %v361
        %387 = vmatprep.subr.mxu0 0.0
        %388 = vmatpush1.msra.mxu0 %v362
        %389 = vmatprep.subr.mxu0 0.0
        %390 = vmatpush1.msra.mxu0 %v363
        %391 = vmatprep.subr.mxu0 0.0
        %392 = vmatpush1.msra.mxu0 0.0
        %393 = vmatprep.subr.mxu0 0.0
        %394 = vmatpush1.msra.mxu0 0.0
        %395 = vmatprep.subr.mxu0 0.0
        %396 = vmatpush1.msra.mxu0 0.0
        %397 = vmatprep.subr.mxu0 0.0
        %398 = vmatpush1.msra.mxu0 0.0
        %399 = vmatprep.subr.mxu0 0.0
        %400 = vmatpush1.msra.mxu0 0.0
        %401 = vmatprep.subr.mxu0 0.0
        %402 = vmatpush1.msra.mxu0 0.0
        %403 = vmatprep.subr.mxu0 0.0
        %404 = vmatpush1.msra.mxu0 0.0
        %405 = vmatprep.subr.mxu0 0.0
        %406 = vmatpush1.msra.mxu0 0.0
        %407 = vmatprep.subr.mxu0 0.0
        %408 = vmatpush1.msra.mxu0 0.0
        %409 = vmatprep.subr.mxu0 0.0
        %410 = vmatpush1.msra.mxu0 0.0
        %411 = vmatprep.subr.mxu0 0.0
        %412 = vmatpush1.msra.mxu0 0.0
        %413 = vmatprep.subr.mxu0 0.0
        %414 = vmatpush1.msra.mxu0 0.0
        %415 = vmatprep.subr.mxu0 0.0
        %416 = vmatpush1.msra.mxu0 0.0
        %417 = vmatprep.subr.mxu0 0.0
        %418 = vmatpush1.msra.mxu0 0.0
        %419 = vmatprep.subr.mxu0 0.0
        %420 = vmatpush1.msra.mxu0 0.0
        %421 = vmatprep.subr.mxu0 0.0
        %422 = vmatpush1.msra.mxu0 0.0
        %423 = vmatprep.subr.mxu0 0.0
        %424 = vmatpush1.msra.mxu0 0.0
        %425 = vmatprep.subr.mxu0 0.0
        %426 = vmatpush1.msra.mxu0 0.0
        %427 = vmatprep.subr.mxu0 0.0
        %428 = vmatpush1.msra.mxu0 0.0
        %429 = vmatprep.subr.mxu0 0.0
        %430 = vmatpush1.msra.mxu0 0.0
        %431 = vmatprep.subr.mxu0 0.0
        %432 = vmatpush1.msra.mxu0 0.0
        %433 = vmatprep.subr.mxu0 0.0
        %434 = vmatpush1.msra.mxu0 0.0
        %435 = vmatprep.subr.mxu0 0.0
        %436 = vmatpush1.msra.mxu0 0.0
        %437 = vmatprep.subr.mxu0 0.0
        %438 = vmatpush1.msra.mxu0 0.0
        %439 = vmatprep.mubr.f32.mxu0 0.0
        %440 = vmatmul.mubr.f32.gmra.mrb[0].mxu0 %v373
        %v441 = vpop.f32.mrb[0].mxu0
        %v442 = vadd.f32 %v369, %v441
        %v443 = vpop.f32.mrb[0].mxu0
        %444 = vdwg.mxu0
        %445 = vst [vmem:[%s268] sm:$0xff] %v442
        %s446 = sand.u32 %s141, 1
        %s447 = scalar_lea.sflag [#allocation4], %s446
        %s448 = sand.u32 %s141, 1
        %s449 = smul.addr %s448, 8
        %s450 = scalar_lea.vmem [#allocation8], %s449
        // Predicated region
        $region53: #{tpu_custom_call.1} parent=39 // pred_check
          %p451 = pneg %p151
        $region54: #{tpu_custom_call.1} parent=39 // pred_check_branch
          %453 = sbr.rel (%p451) target = $region56
        $region55: #{tpu_custom_call.1} parent=39 // pred_region
          %s455 = ssub.s32 128, 128
          %456 = vsyncadd %s447, %s455
          %s457 = smul.addr %s23, 128
          %s458 = scalar_lea.hbm %s5, %s457
          %s460 = sshll.u32 %s450, 4
          %s461 = int_to_ptr.vmem [resolvable:$true] %s460
          %463 = dma.vmem_to_hbm [thread:$0]  %s461, 128, %s458, %s447
        $region56: #{tpu_custom_call.1} parent=39 // pred_fallthru
          _
      $region40: #{tpu_custom_call.1} parent=5 // pred_fallthru
        _
      %p464 = scmp.le.s32.totalorder 2, %s18
      // Predicated region
      $region57: #{tpu_custom_call.1} parent=5 // pred_check
        %p465 = pneg %p464
      $region58: #{tpu_custom_call.1} parent=5 // pred_check_branch
        %467 = sbr.rel (%p465) target = $region60
      $region59: #{tpu_custom_call.1} parent=5 // pred_region
        %s468 = ssub.s32 %s18, 2
        // Predicated region
        $region61: #{tpu_custom_call.1} parent=59 // pred_check
          %p469 = pneg %p157
        $region62: #{tpu_custom_call.1} parent=59 // pred_check_branch
          %471 = sbr.rel (%p469) target = $region64
        $region63: #{tpu_custom_call.1} parent=59 // pred_region
          %s472 = sand.u32 %s142, 1
          %s473 = scalar_lea.sflag [#allocation4], %s472
          %s474 = sand.u32 %s142, 1
          %s475 = smul.addr %s474, 8
          %s476 = scalar_lea.vmem [#allocation8], %s475
          %477 = dma.done %s473, 128
        $region64: #{tpu_custom_call.1} parent=59 // pred_fallthru
          _
      $region60: #{tpu_custom_call.1} parent=5 // pred_fallthru
        _
    $region6: #{tpu_custom_call.1} parent=1 // loop_footer
      %s22 = sadd.s32 1, %s18
    $region7: #{tpu_custom_call.1} parent=1 // loop_footer_branch
      %17 = sbr.rel target = $region3
    $region8: #{tpu_custom_call.1} parent=1 // loop_exit
      _
    %478 = vsyncpa [#allocation3], 1
    %s479 = scalar_lea.sflag [#allocation3], 1
    %480 = vsyncpa %s479, 1
    %481 = vsyncpa [#allocation6], 1
    %482 = vsyncpa [#allocation4], 1
    %s483 = scalar_lea.sflag [#allocation4], 1
    %484 = vsyncpa %s483, 1

</llo_original>
